<compile_context>
chip_gen: v7x
topology: tpu7x:2x2x1
jax: 0.10.0
libtpu: 0.0.40
codegen_flags: <defaults>
</compile_context>

<pallas_src>
import jax
import jax.numpy as jnp
from jax.experimental import pallas as pl
from jax.experimental.pallas import tpu as pltpu

# ---- model configuration (32/64/16 internal widths are hard-coded by the module) ----
BATCH = 8
STIM_DIM = 4          # stimulus_dim
ENC_H1 = 32           # first encoder Linear width (fixed in module)
ENC_OUT = 64          # second encoder Linear width / conv in-channels (fixed)
CONV_OUT = 16         # conv out-channels / LSTM input size (fixed)
HIDDEN = 32           # hidden_size
OUT_T = 16            # output_timesteps
N_CH = 8              # n_channels
GATES = 4 * HIDDEN    # 128
OUT_DIM = OUT_T * N_CH  # 128

# ---- parameter-slab layout: one (72, 128) f32 array, carved with static slices ----
ROW_WF = 0                         # rows  0..31 : W_fused (32, 128)
ROW_WD = ROW_WF + ENC_H1           # rows 32..63 : wd      (32, 128)
ROW_BF = ROW_WD + HIDDEN           # row  64     : b_fused (1, 128)
ROW_BD = ROW_BF + 1                # row  65     : bd      (1, 128)
ROW_W1 = ROW_BD + 1                # rows 66..69 : w1      (4, 32) in lanes 0:32
ROW_B1 = ROW_W1 + STIM_DIM         # row  70     : b1      (1, 32) in lanes 0:32
SLAB_ROWS = 72                     # padded to a multiple of 8 sublanes
SLAB_LANES = GATES                 # 128


def s2b_kernel(x_ref, slab_ref, out_ref):
    x = x_ref[...]                                            # (B, STIM_DIM)

    # Static ref slices into the packed parameter slab (zero-cost views).
    w_fused = slab_ref[ROW_WF:ROW_WF + ENC_H1, :]             # (32, 128)
    wd      = slab_ref[ROW_WD:ROW_WD + HIDDEN, :]             # (32, 128)
    b_fused = slab_ref[ROW_BF:ROW_BF + 1, :]                  # (1, 128)
    bd      = slab_ref[ROW_BD:ROW_BD + 1, :]                  # (1, 128)
    w1      = slab_ref[ROW_W1:ROW_W1 + STIM_DIM, 0:ENC_H1]    # (4, 32)
    b1      = slab_ref[ROW_B1:ROW_B1 + 1, 0:ENC_H1]           # (1, 32)

    # stim_encoder first Linear + ReLU via VPU broadcast-FMAs (K=4 would waste an
    # MXU pass at the head of the serial dependency chain).
    acc = b1                                                  # (1, 32) -> broadcasts
    for k in range(STIM_DIM):                                 # unrolled at trace time
        acc = acc + x[:, k:k + 1] * w1[k:k + 1, :]
    h1 = jnp.maximum(acc, 0.0)                                # (B, 32)

    # Fused enc->conv->LSTM-input projection: gates pre-activations (i, f, g, o).
    gates = jnp.dot(h1, w_fused, preferred_element_type=jnp.float32) + b_fused  # (B,128)

    # Full-vreg transcendentals once, then static lane slices for i / g / o.
    sg = jax.nn.sigmoid(gates)
    th = jnp.tanh(gates)
    i_g = sg[:, 0 * HIDDEN:1 * HIDDEN]
    g_g = th[:, 2 * HIDDEN:3 * HIDDEN]
    o_g = sg[:, 3 * HIDDEN:4 * HIDDEN]
    # forget gate multiplies c0 == 0 (single-step LSTM) -> dropped.
    c = i_g * g_g
    h = o_g * jnp.tanh(c)                                     # (B, HIDDEN)

    # decoder Linear(HIDDEN -> OUT_T * N_CH); nn.Unflatten happens in the wrapper.
    out_ref[...] = jnp.dot(h, wd, preferred_element_type=jnp.float32) + bd


def stimulus_to_brainwave(x, slab):
    vm = pl.BlockSpec(memory_space=pltpu.MemorySpace.VMEM)
    out_flat = pl.pallas_call(
        s2b_kernel,
        out_shape=jax.ShapeDtypeStruct((x.shape[0], OUT_DIM), jnp.float32),
        in_specs=[vm, vm],
        out_specs=vm,
    )(x, slab)
    # nn.Unflatten(1, (output_timesteps, n_channels))
    return out_flat.reshape(x.shape[0], OUT_T, N_CH)


def init_params(key):
    ks = jax.random.split(key, 11)

    def rn(k, shape, scale=0.1):
        return scale * jax.random.normal(k, shape, dtype=jnp.float32)

    # PyTorch Linear stores (out, in); we keep the transposed (in, out) layout.
    w1 = rn(ks[0], (STIM_DIM, ENC_H1))
    b1 = rn(ks[1], (1, ENC_H1))
    w2 = rn(ks[2], (ENC_H1, ENC_OUT))
    b2 = rn(ks[3], (1, ENC_OUT))
    # Conv1d weight is (out=16, in=64, k=3); only the center tap reaches real data.
    w_conv_full = rn(ks[4], (CONV_OUT, ENC_OUT, 3))
    wc = jnp.transpose(w_conv_full[:, :, 1])                  # (64, 16)
    bc = rn(ks[5], (1, CONV_OUT))
    # LSTM input projection (gate order i, f, g, o), stored transposed: (16, 4H).
    # W_hh multiplies h0 == 0 for a 1-step LSTM and is never materialized.
    wih = jnp.transpose(rn(ks[6], (4 * HIDDEN, CONV_OUT)))    # (16, 128)
    bih = rn(ks[7], (1, 4 * HIDDEN))
    bhh = rn(ks[8], (1, 4 * HIDDEN))
    # Decoder Linear(HIDDEN -> OUT_T * N_CH)
    wd = rn(ks[9], (HIDDEN, OUT_DIM))
    bd = rn(ks[10], (1, OUT_DIM))
    return dict(w1=w1, b1=b1, w2=w2, b2=b2, wc=wc, bc=bc,
                wih=wih, bih=bih, bhh=bhh, wd=wd, bd=bd)


def pack_params(p):
    """Fold the linear chain offline (full f32 precision) and pack one weight slab."""
    hi = jax.lax.Precision.HIGHEST
    w_fused = jnp.dot(jnp.dot(p["w2"], p["wc"], precision=hi), p["wih"], precision=hi)
    b_fused = (jnp.dot(jnp.dot(p["b2"], p["wc"], precision=hi) + p["bc"],
                       p["wih"], precision=hi)
               + p["bih"] + p["bhh"])

    slab = jnp.zeros((SLAB_ROWS, SLAB_LANES), dtype=jnp.float32)
    slab = slab.at[ROW_WF:ROW_WF + ENC_H1, :].set(w_fused)
    slab = slab.at[ROW_WD:ROW_WD + HIDDEN, :].set(p["wd"])
    slab = slab.at[ROW_BF, :].set(b_fused[0])
    slab = slab.at[ROW_BD, :].set(p["bd"][0])
    slab = slab.at[ROW_W1:ROW_W1 + STIM_DIM, 0:ENC_H1].set(p["w1"])
    slab = slab.at[ROW_B1, 0:ENC_H1].set(p["b1"][0])
    return slab, w_fused, b_fused


def reference_fused(x, p, w_fused, b_fused):
    # Pure-JAX reference with the exact same (fused) structure as the kernel.
    acc = p["b1"]
    for k in range(STIM_DIM):
        acc = acc + x[:, k:k + 1] * p["w1"][k:k + 1, :]
    h1 = jnp.maximum(acc, 0.0)
    gates = h1 @ w_fused + b_fused
    sg = jax.nn.sigmoid(gates)
    th = jnp.tanh(gates)
    c = sg[:, :HIDDEN] * th[:, 2 * HIDDEN:3 * HIDDEN]
    h = sg[:, 3 * HIDDEN:] * jnp.tanh(c)
    out = h @ p["wd"] + p["bd"]
    return out.reshape(x.shape[0], OUT_T, N_CH)


def reference_module(x, p):
    # Faithful unfused path of the original module (f32, highest precision).
    hi = jax.lax.Precision.HIGHEST
    h1 = jnp.maximum(jnp.dot(x, p["w1"], precision=hi) + p["b1"], 0.0)
    enc = jnp.dot(h1, p["w2"], precision=hi) + p["b2"]
    cnn = jnp.dot(enc, p["wc"], precision=hi) + p["bc"]
    gates = jnp.dot(cnn, p["wih"], precision=hi) + p["bih"] + p["bhh"]
    i_g, f_g, g_g, o_g = jnp.split(gates, 4, axis=1)
    c = jax.nn.sigmoid(i_g) * jnp.tanh(g_g)        # + sigmoid(f_g) * c0, c0 = 0
    h = jax.nn.sigmoid(o_g) * jnp.tanh(c)
    out = jnp.dot(h, p["wd"], precision=hi) + p["bd"]
    return out.reshape(x.shape[0], OUT_T, N_CH)


if __name__ == "__main__":
    key = jax.random.PRNGKey(0)
    k_x, k_p = jax.random.split(key)
    x = jax.random.normal(k_x, (BATCH, STIM_DIM), dtype=jnp.float32)
    params = init_params(k_p)
    slab, w_fused, b_fused = pack_params(params)

    out = jax.block_until_ready(stimulus_to_brainwave(x, slab))
    assert out.shape == (BATCH, OUT_T, N_CH), out.shape

    # Tight check vs. a fused reference with identical structure/precision.
    ref_f = jax.block_until_ready(reference_fused(x, params, w_fused, b_fused))
    assert jnp.allclose(out, ref_f, atol=1e-5, rtol=1e-5), "mismatch vs fused reference"

    # Loose check vs. the faithful unfused module path (covers MXU default-precision
    # rounding differences introduced by the offline fold).
    ref_m = jax.block_until_ready(reference_module(x, params))
    assert jnp.allclose(out, ref_m, atol=5e-3, rtol=5e-3), "mismatch vs module reference"

    print("KERNEL_OK")
</pallas_src>

<mosaic_0001>
module attributes {stable_mosaic.version = 11 : i64} {
  func.func @s2b_kernel(%arg0: memref<8x4xf32, #tpu.memory_space<vmem>>, %arg1: memref<72x128xf32, #tpu.memory_space<vmem>>, %arg2: memref<8x128xf32, #tpu.memory_space<vmem>>) attributes {dimension_semantics = [], scalar_prefetch = 0 : i64, scratch_operands = 0 : i64, tpu.core_type = #tpu.core_type<tc>} {
    %c0 = arith.constant 0 : index
    %c0_0 = arith.constant 0 : index
    %0 = vector.load %arg0[%c0, %c0_0] : memref<8x4xf32, #tpu.memory_space<vmem>>, vector<8x4xf32>
    %c0_1 = arith.constant 0 : index
    %c0_2 = arith.constant 0 : index
    %1 = vector.load %arg1[%c0_1, %c0_2] : memref<72x128xf32, #tpu.memory_space<vmem>>, vector<32x128xf32>
    %c32 = arith.constant 32 : index
    %c0_3 = arith.constant 0 : index
    %2 = vector.load %arg1[%c32, %c0_3] : memref<72x128xf32, #tpu.memory_space<vmem>>, vector<32x128xf32>
    %c64 = arith.constant 64 : index
    %c0_4 = arith.constant 0 : index
    %3 = vector.load %arg1[%c64, %c0_4] : memref<72x128xf32, #tpu.memory_space<vmem>>, vector<1x128xf32>
    %c65 = arith.constant 65 : index
    %c0_5 = arith.constant 0 : index
    %4 = vector.load %arg1[%c65, %c0_5] : memref<72x128xf32, #tpu.memory_space<vmem>>, vector<1x128xf32>
    %c66 = arith.constant 66 : index
    %c0_6 = arith.constant 0 : index
    %5 = vector.load %arg1[%c66, %c0_6] : memref<72x128xf32, #tpu.memory_space<vmem>>, vector<4x32xf32>
    %c70 = arith.constant 70 : index
    %c0_7 = arith.constant 0 : index
    %6 = vector.load %arg1[%c70, %c0_7] : memref<72x128xf32, #tpu.memory_space<vmem>>, vector<1x32xf32>
    %7 = vector.extract_strided_slice %0 {offsets = [0, 0], sizes = [8, 1], strides = [1, 1]} : vector<8x4xf32> to vector<8x1xf32>
    %8 = vector.extract_strided_slice %5 {offsets = [0, 0], sizes = [1, 32], strides = [1, 1]} : vector<4x32xf32> to vector<1x32xf32>
    %9 = vector.broadcast %7 : vector<8x1xf32> to vector<8x32xf32>
    %10 = vector.broadcast %8 : vector<1x32xf32> to vector<8x32xf32>
    %11 = arith.mulf %9, %10 : vector<8x32xf32>
    %12 = vector.broadcast %6 : vector<1x32xf32> to vector<8x32xf32>
    %13 = arith.addf %12, %11 : vector<8x32xf32>
    %14 = vector.extract_strided_slice %0 {offsets = [0, 1], sizes = [8, 1], strides = [1, 1]} : vector<8x4xf32> to vector<8x1xf32>
    %15 = vector.extract_strided_slice %5 {offsets = [1, 0], sizes = [1, 32], strides = [1, 1]} : vector<4x32xf32> to vector<1x32xf32>
    %16 = vector.broadcast %14 : vector<8x1xf32> to vector<8x32xf32>
    %17 = vector.broadcast %15 : vector<1x32xf32> to vector<8x32xf32>
    %18 = arith.mulf %16, %17 : vector<8x32xf32>
    %19 = arith.addf %13, %18 : vector<8x32xf32>
    %20 = vector.extract_strided_slice %0 {offsets = [0, 2], sizes = [8, 1], strides = [1, 1]} : vector<8x4xf32> to vector<8x1xf32>
    %21 = vector.extract_strided_slice %5 {offsets = [2, 0], sizes = [1, 32], strides = [1, 1]} : vector<4x32xf32> to vector<1x32xf32>
    %22 = vector.broadcast %20 : vector<8x1xf32> to vector<8x32xf32>
    %23 = vector.broadcast %21 : vector<1x32xf32> to vector<8x32xf32>
    %24 = arith.mulf %22, %23 : vector<8x32xf32>
    %25 = arith.addf %19, %24 : vector<8x32xf32>
    %26 = vector.extract_strided_slice %0 {offsets = [0, 3], sizes = [8, 1], strides = [1, 1]} : vector<8x4xf32> to vector<8x1xf32>
    %27 = vector.extract_strided_slice %5 {offsets = [3, 0], sizes = [1, 32], strides = [1, 1]} : vector<4x32xf32> to vector<1x32xf32>
    %28 = vector.broadcast %26 : vector<8x1xf32> to vector<8x32xf32>
    %29 = vector.broadcast %27 : vector<1x32xf32> to vector<8x32xf32>
    %30 = arith.mulf %28, %29 : vector<8x32xf32>
    %31 = arith.addf %25, %30 : vector<8x32xf32>
    %cst = arith.constant 0.000000e+00 : f32
    %32 = vector.broadcast %cst : f32 to vector<8x32xf32>
    %33 = arith.maximumf %31, %32 : vector<8x32xf32>
    %cst_8 = arith.constant dense<0.000000e+00> : vector<8x128xf32>
    %34 = tpu.matmul %33, %1, %cst_8 {dimension_numbers = #tpu.dot_dimension_numbers<[1], [0], [0], [1], [0, 0, 1, 1], [], []>} : vector<8x32xf32>, vector<32x128xf32>, vector<8x128xf32> -> vector<8x128xf32>
    %35 = vector.broadcast %3 : vector<1x128xf32> to vector<8x128xf32>
    %36 = arith.addf %34, %35 : vector<8x128xf32>
    %37 = arith.negf %36 : vector<8x128xf32>
    %38 = math.exp %37 : vector<8x128xf32>
    %cst_9 = arith.constant 1.000000e+00 : f32
    %39 = vector.broadcast %cst_9 : f32 to vector<8x128xf32>
    %40 = arith.addf %39, %38 : vector<8x128xf32>
    %41 = arith.divf %39, %40 : vector<8x128xf32>
    %42 = math.tanh %36 : vector<8x128xf32>
    %43 = vector.extract_strided_slice %41 {offsets = [0, 0], sizes = [8, 32], strides = [1, 1]} : vector<8x128xf32> to vector<8x32xf32>
    %44 = vector.extract_strided_slice %42 {offsets = [0, 64], sizes = [8, 32], strides = [1, 1]} : vector<8x128xf32> to vector<8x32xf32>
    %45 = vector.extract_strided_slice %41 {offsets = [0, 96], sizes = [8, 32], strides = [1, 1]} : vector<8x128xf32> to vector<8x32xf32>
    %46 = arith.mulf %43, %44 : vector<8x32xf32>
    %47 = math.tanh %46 : vector<8x32xf32>
    %48 = arith.mulf %45, %47 : vector<8x32xf32>
    %cst_10 = arith.constant dense<0.000000e+00> : vector<8x128xf32>
    %49 = tpu.matmul %48, %2, %cst_10 {dimension_numbers = #tpu.dot_dimension_numbers<[1], [0], [0], [1], [0, 0, 1, 1], [], []>} : vector<8x32xf32>, vector<32x128xf32>, vector<8x128xf32> -> vector<8x128xf32>
    %50 = vector.broadcast %4 : vector<1x128xf32> to vector<8x128xf32>
    %51 = arith.addf %49, %50 : vector<8x128xf32>
    %c0_11 = arith.constant 0 : index
    %c0_12 = arith.constant 0 : index
    %52 = vector.load %arg2[%c0_11, %c0_12] : memref<8x128xf32, #tpu.memory_space<vmem>>, vector<8x128xf32>
    tpu.vector_store %arg2[%c0_11, %c0_12], %51 {strides = array<i32>} : memref<8x128xf32, #tpu.memory_space<vmem>>, vector<8x128xf32>,
    return
  }
}

</mosaic_0001>

<llo_original>
// kernel: tpu_custom_call.1
$region0: #{tpu_custom_call.1}
  #allocation0 [shape = 'u32[]', space=smem, size = 0x4, offset = 0x4, fixed_abs, tag = 'smem constant byte address 0x4 - core index']
  #allocation1 [shape = 'u32[144,128]{1,0:T(1,128)}', space=vmem, size = 0x12000, scoped, tag = 'internal scratch']
  %s0 = inlined_call_operand.vmem [shape: f32[8,4], index: 0, kind: input, shape index: {}]
  %s1 = inlined_call_operand.hbm [shape: f32[72,128], index: 1, kind: input, shape index: {}]
  %s2 = inlined_call_operand.hbm [shape: f32[8,128], index: 2, kind: output, shape index: {}]
  %s3 = sld [smem:[#allocation0]]
  $region22: #{tpu_custom_call.1} parent=0
    _
  %s5 = ssub.s32 1, %s3
  %s6 = scalar_select 0, %s5, %s3
  $region1: #{tpu_custom_call.1} parent=0
    #allocation2 [shape = 'u8[36864]{0}', space=vmem, size = 0x9000, scoped, tag = 'input window, operand 1, single buffered']
    #allocation3 [shape = 's32[1]{0}', space=sflag, size = 0x4, scoped, tag = 'scoped memory for tpu_custom_call.1']
    #allocation4 [shape = 's32[1]{0}', space=sflag, size = 0x4, scoped, tag = 'scoped memory for tpu_custom_call.1']
    #allocation5 [shape = 'u8[4096]{0}', space=vmem, size = 0x1000, scoped, tag = 'output window, operand 0, single buffered']
    %7 = vsyncpa [#allocation3], 0
    %8 = vsyncpa [#allocation4], 0
    // Predicated region
    $region2: #{tpu_custom_call.1} parent=1 // pred_check
      _
    $region3: #{tpu_custom_call.1} parent=1 // pred_check_branch
      %10 = sbr.rel (0) target = $region5
    $region4: #{tpu_custom_call.1} parent=1 // pred_region
      _
    $region5: #{tpu_custom_call.1} parent=1 // pred_fallthru
      _
    // Predicated region
    $region6: #{tpu_custom_call.1} parent=1 // pred_check
      _
    $region7: #{tpu_custom_call.1} parent=1 // pred_check_branch
      %12 = sbr.rel (0) target = $region9
    $region8: #{tpu_custom_call.1} parent=1 // pred_region
      %s14 = ssub.s32 1152, 1152
      %15 = vsyncadd [#allocation3], %s14
      %s16 = sshll.u32 [#allocation2], 4
      %s17 = int_to_ptr.vmem [resolvable:$true] %s16
      %22 = dma.hbm_to_vmem [thread:$0]  %s1, 1152, %s17, [#allocation3], 128, 128, 8
    $region9: #{tpu_custom_call.1} parent=1 // pred_fallthru
      _
    // Predicated region
    $region10: #{tpu_custom_call.1} parent=1 // pred_check
      _
    $region11: #{tpu_custom_call.1} parent=1 // pred_check_branch
      %24 = sbr.rel (0) target = $region13
    $region12: #{tpu_custom_call.1} parent=1 // pred_region
      %25 = dma.done [#allocation3], 1152
    $region13: #{tpu_custom_call.1} parent=1 // pred_fallthru
      _
    %v26 = vld [vmem:[%s0] sm:$0xff]
    %v27 = vld [vmem:[#allocation2] sm:$0xff]
    %v28 = vld [vmem:[#allocation2 + $0x8] sm:$0xff]
    %v29 = vld [vmem:[#allocation2 + $0x10] sm:$0xff]
    %v30 = vld [vmem:[#allocation2 + $0x18] sm:$0xff]
    %v31 = vld [vmem:[#allocation2 + $0x20] sm:$0xff]
    %v32 = vld [vmem:[#allocation2 + $0x28] sm:$0xff]
    %v33 = vld [vmem:[#allocation2 + $0x30] sm:$0xff]
    %v34 = vld [vmem:[#allocation2 + $0x38] sm:$0xff]
    %v35 = vld [vmem:[#allocation2 + $0x40] sm:$0x1]
    %v36 = vld [vmem:[#allocation2 + $0x41] sm:$0x1]
    %v37 = vld [vmem:[#allocation2 + $0x42] sm:$0xf]
    %v38 = vld [vmem:[#allocation2 + $0x46] sm:$0x1]
    %40 = vset.pattern.permute.xlu0 0
    %41 = vperm.xlu0 %40, %v26
    %v42 = vpop.permute.xlu0 %41
    %v44 = vlaneseq
    %v45 = vshrl.u32 %v44, 7
    %v46 = vsub.s32 0, %v45
    %v47 = vrot.slane %v37, %v46
    %v48 = vmul.f32 %v42, %v47
    %v49 = vlaneseq
    %v50 = vshrl.u32 %v49, 7
    %v51 = vsub.s32 0, %v50
    %v52 = vrot.slane %v38, %v51
    %v53 = vadd.f32 %v52, %v48
    %54 = vset.pattern.permute.xlu0 1
    %55 = vperm.xlu0 %54, %v26
    %v56 = vpop.permute.xlu0 %55
    %v58 = vlaneseq
    %v59 = vshrl.u32 %v58, 7
    %v60 = vsub.s32 1, %v59
    %v61 = vrot.slane %v37, %v60
    %v62 = vmul.f32 %v56, %v61
    %v63 = vadd.f32 %v53, %v62
    %64 = vset.pattern.permute.xlu0 2
    %65 = vperm.xlu0 %64, %v26
    %v66 = vpop.permute.xlu0 %65
    %v68 = vlaneseq
    %v69 = vshrl.u32 %v68, 7
    %v70 = vsub.s32 2, %v69
    %v71 = vrot.slane %v37, %v70
    %v72 = vmul.f32 %v66, %v71
    %v73 = vadd.f32 %v63, %v72
    %74 = vset.pattern.permute.xlu0 3
    %75 = vperm.xlu0 %74, %v26
    %v76 = vpop.permute.xlu0 %75
    %v78 = vlaneseq
    %v79 = vshrl.u32 %v78, 7
    %v80 = vsub.s32 3, %v79
    %v81 = vrot.slane %v37, %v80
    %v82 = vmul.f32 %v76, %v81
    %v83 = vadd.f32 %v73, %v82
    %v84 = vmax.f32 %v83, 0.0
    %v85 = vlaneseq
    %v86 = vshrl.u32 %v85, 7
    %v87 = vsub.s32 0, %v86
    %v88 = vrot.slane %v35, %v87
    %vm89 = vcmask 261120
    %v91 = vsel %vm89, %v84, 0
    %93 = vmatprep.subr.mxu0 0.0
    %94 = vmatpush1.msra.mxu0 %v27
    %95 = vmatprep.subr.mxu0 0.0
    %96 = vmatpush1.msra.mxu0 %v28
    %97 = vmatprep.subr.mxu0 0.0
    %98 = vmatpush1.msra.mxu0 %v29
    %99 = vmatprep.subr.mxu0 0.0
    %100 = vmatpush1.msra.mxu0 %v30
    %101 = vmatprep.subr.mxu0 0.0
    %102 = vmatpush1.msra.mxu0 0.0
    %103 = vmatprep.subr.mxu0 0.0
    %104 = vmatpush1.msra.mxu0 0.0
    %105 = vmatprep.subr.mxu0 0.0
    %106 = vmatpush1.msra.mxu0 0.0
    %107 = vmatprep.subr.mxu0 0.0
    %108 = vmatpush1.msra.mxu0 0.0
    %109 = vmatprep.subr.mxu0 0.0
    %110 = vmatpush1.msra.mxu0 0.0
    %111 = vmatprep.subr.mxu0 0.0
    %112 = vmatpush1.msra.mxu0 0.0
    %113 = vmatprep.subr.mxu0 0.0
    %114 = vmatpush1.msra.mxu0 0.0
    %115 = vmatprep.subr.mxu0 0.0
    %116 = vmatpush1.msra.mxu0 0.0
    %117 = vmatprep.subr.mxu0 0.0
    %118 = vmatpush1.msra.mxu0 0.0
    %119 = vmatprep.subr.mxu0 0.0
    %120 = vmatpush1.msra.mxu0 0.0
    %121 = vmatprep.subr.mxu0 0.0
    %122 = vmatpush1.msra.mxu0 0.0
    %123 = vmatprep.subr.mxu0 0.0
    %124 = vmatpush1.msra.mxu0 0.0
    %125 = vmatprep.subr.mxu0 0.0
    %126 = vmatpush1.msra.mxu0 0.0
    %127 = vmatprep.subr.mxu0 0.0
    %128 = vmatpush1.msra.mxu0 0.0
    %129 = vmatprep.subr.mxu0 0.0
    %130 = vmatpush1.msra.mxu0 0.0
    %131 = vmatprep.subr.mxu0 0.0
    %132 = vmatpush1.msra.mxu0 0.0
    %133 = vmatprep.subr.mxu0 0.0
    %134 = vmatpush1.msra.mxu0 0.0
    %135 = vmatprep.subr.mxu0 0.0
    %136 = vmatpush1.msra.mxu0 0.0
    %137 = vmatprep.subr.mxu0 0.0
    %138 = vmatpush1.msra.mxu0 0.0
    %139 = vmatprep.subr.mxu0 0.0
    %140 = vmatpush1.msra.mxu0 0.0
    %141 = vmatprep.subr.mxu0 0.0
    %142 = vmatpush1.msra.mxu0 0.0
    %143 = vmatprep.subr.mxu0 0.0
    %144 = vmatpush1.msra.mxu0 0.0
    %145 = vmatprep.subr.mxu0 0.0
    %146 = vmatpush1.msra.mxu0 0.0
    %147 = vmatprep.subr.mxu0 0.0
    %148 = vmatpush1.msra.mxu0 0.0
    %149 = vmatprep.subr.mxu0 0.0
    %150 = vmatpush1.msra.mxu0 0.0
    %151 = vmatprep.subr.mxu0 0.0
    %152 = vmatpush1.msra.mxu0 0.0
    %153 = vmatprep.subr.mxu0 0.0
    %154 = vmatpush1.msra.mxu0 0.0
    %155 = vmatprep.subr.mxu0 0.0
    %156 = vmatpush1.msra.mxu0 0.0
    %157 = vmatprep.mubr.f32.mxu0 0.0
    %158 = vmatmul.mubr.f32.gmra.mrb[0].mxu0 %v91
    %v159 = vpop.f32.mrb[0].mxu0
    %v160 = vadd.f32 %v88, %v159
    %v161 = vpop.f32.mrb[0].mxu0
    %162 = vdwg.mxu0
    %v163 = vxor.u32 %v160, 2147483648
    %v164 = vmul.f32 %v163, 1.442695
    %v165 = vpow.pop %v164
    %v166 = vadd.f32 %v165, 1.0
    %v167 = vrcp.pop %v166
    %v168 = vmul.f32 1.0, %v167
    %v169 = vtanh.pop %v160
    %171 = vrot.lane.b32.xlu0 %v169, 64
    %v172 = vpop.permute.xlu0 %171
    %v174 = vmul.f32 %v168, %v172
    %v175 = vtanh.pop %v174
    %177 = vrot.lane.b32.xlu0 %v175, 96
    %v178 = vpop.permute.xlu0 %177
    %v180 = vmul.f32 %v168, %v178
    %v181 = vlaneseq
    %v182 = vshrl.u32 %v181, 7
    %v183 = vsub.s32 0, %v182
    %v184 = vrot.slane %v36, %v183
    %186 = vrot.lane.b32.xlu0 %v180, 32
    %v187 = vpop.permute.xlu0 %186
    %v188 = vsel %vm89, %v187, 0
    %190 = vmatprep.subr.mxu0 0.0
    %191 = vmatpush1.msra.mxu0 %v31
    %192 = vmatprep.subr.mxu0 0.0
    %193 = vmatpush1.msra.mxu0 %v32
    %194 = vmatprep.subr.mxu0 0.0
    %195 = vmatpush1.msra.mxu0 %v33
    %196 = vmatprep.subr.mxu0 0.0
    %197 = vmatpush1.msra.mxu0 %v34
    %198 = vmatprep.subr.mxu0 0.0
    %199 = vmatpush1.msra.mxu0 0.0
    %200 = vmatprep.subr.mxu0 0.0
    %201 = vmatpush1.msra.mxu0 0.0
    %202 = vmatprep.subr.mxu0 0.0
    %203 = vmatpush1.msra.mxu0 0.0
    %204 = vmatprep.subr.mxu0 0.0
    %205 = vmatpush1.msra.mxu0 0.0
    %206 = vmatprep.subr.mxu0 0.0
    %207 = vmatpush1.msra.mxu0 0.0
    %208 = vmatprep.subr.mxu0 0.0
    %209 = vmatpush1.msra.mxu0 0.0
    %210 = vmatprep.subr.mxu0 0.0
    %211 = vmatpush1.msra.mxu0 0.0
    %212 = vmatprep.subr.mxu0 0.0
    %213 = vmatpush1.msra.mxu0 0.0
    %214 = vmatprep.subr.mxu0 0.0
    %215 = vmatpush1.msra.mxu0 0.0
    %216 = vmatprep.subr.mxu0 0.0
    %217 = vmatpush1.msra.mxu0 0.0
    %218 = vmatprep.subr.mxu0 0.0
    %219 = vmatpush1.msra.mxu0 0.0
    %220 = vmatprep.subr.mxu0 0.0
    %221 = vmatpush1.msra.mxu0 0.0
    %222 = vmatprep.subr.mxu0 0.0
    %223 = vmatpush1.msra.mxu0 0.0
    %224 = vmatprep.subr.mxu0 0.0
    %225 = vmatpush1.msra.mxu0 0.0
    %226 = vmatprep.subr.mxu0 0.0
    %227 = vmatpush1.msra.mxu0 0.0
    %228 = vmatprep.subr.mxu0 0.0
    %229 = vmatpush1.msra.mxu0 0.0
    %230 = vmatprep.subr.mxu0 0.0
    %231 = vmatpush1.msra.mxu0 0.0
    %232 = vmatprep.subr.mxu0 0.0
    %233 = vmatpush1.msra.mxu0 0.0
    %234 = vmatprep.subr.mxu0 0.0
    %235 = vmatpush1.msra.mxu0 0.0
    %236 = vmatprep.subr.mxu0 0.0
    %237 = vmatpush1.msra.mxu0 0.0
    %238 = vmatprep.subr.mxu0 0.0
    %239 = vmatpush1.msra.mxu0 0.0
    %240 = vmatprep.subr.mxu0 0.0
    %241 = vmatpush1.msra.mxu0 0.0
    %242 = vmatprep.subr.mxu0 0.0
    %243 = vmatpush1.msra.mxu0 0.0
    %244 = vmatprep.subr.mxu0 0.0
    %245 = vmatpush1.msra.mxu0 0.0
    %246 = vmatprep.subr.mxu0 0.0
    %247 = vmatpush1.msra.mxu0 0.0
    %248 = vmatprep.subr.mxu0 0.0
    %249 = vmatpush1.msra.mxu0 0.0
    %250 = vmatprep.subr.mxu0 0.0
    %251 = vmatpush1.msra.mxu0 0.0
    %252 = vmatprep.subr.mxu0 0.0
    %253 = vmatpush1.msra.mxu0 0.0
    %254 = vmatprep.mubr.f32.mxu0 0.0
    %255 = vmatmul.mubr.f32.gmra.mrb[0].mxu0 %v188
    %v256 = vpop.f32.mrb[0].mxu0
    %v257 = vadd.f32 %v184, %v256
    %v258 = vpop.f32.mrb[0].mxu0
    %259 = vdwg.mxu0
    %260 = vst [vmem:[#allocation5] sm:$0xff] %v257
    // Predicated region
    $region14: #{tpu_custom_call.1} parent=1 // pred_check
      _
    $region15: #{tpu_custom_call.1} parent=1 // pred_check_branch
      %262 = sbr.rel (0) target = $region17
    $region16: #{tpu_custom_call.1} parent=1 // pred_region
      %s264 = ssub.s32 128, 128
      %265 = vsyncadd [#allocation4], %s264
      %s267 = sshll.u32 [#allocation5], 4
      %s268 = int_to_ptr.vmem [resolvable:$true] %s267
      %270 = dma.vmem_to_hbm [thread:$0]  %s268, 128, %s2, [#allocation4]
    $region17: #{tpu_custom_call.1} parent=1 // pred_fallthru
      _
    // Predicated region
    $region18: #{tpu_custom_call.1} parent=1 // pred_check
      _
    $region19: #{tpu_custom_call.1} parent=1 // pred_check_branch
      %272 = sbr.rel (0) target = $region21
    $region20: #{tpu_custom_call.1} parent=1 // pred_region
      %273 = dma.done [#allocation4], 128
    $region21: #{tpu_custom_call.1} parent=1 // pred_fallthru
      _
    %274 = vsyncpa [#allocation3], 1
    %275 = vsyncpa [#allocation4], 1

</llo_original>
